<compile_context>
chip_gen: v5e
topology: v5e:2x2
jax: 0.10.0
libtpu: 0.0.40
codegen_flags: <defaults>
</compile_context>

<pallas_src>
import jax
import jax.numpy as jnp
import numpy as np
from jax import lax
from jax.experimental import pallas as pl
from jax.experimental.pallas import tpu as pltpu

BN_EPS = 1e-5


# ------------------------------ fused kernel --------------------------------

def _dsampling_kernel(x_taps_ref, pad_ref, w_bd_ref, b_r1_ref,
                      w_x_ref, w_r_ref, w_pad_ref, b_out_ref, o_ref):
    """One image per grid step. All refs are 2-D, matmul-ready (no reshapes).

    x_taps_ref : (9C, Ho*Wo) the 9 stride-2 taps of the zero-padded input,
                             stacked along the contraction (sublane) dim.
    pad_ref    : (9,  Ho*Wo) 1.0 where tap k reads a padded pixel.
    w_bd_ref   : (9C, 9C)    block-diagonal conv_r1 weight (BN scale folded).
    b_r1_ref   : (9C, 1)     conv_r1 folded BN bias, tiled per tap.
    w_x_ref    : (2C, 9C)    left-branch  dw*pw fused weight (rows already
                             permuted for concat + double channel shuffle).
    w_r_ref    : (2C, 9C)    right-branch dw*pw fused weight (same permutation).
    w_pad_ref  : (2C, 9)     padded-ring correction (right branch only).
    b_out_ref  : (2C, 1)     fused output bias (final channel order).
    o_ref      : (2C, Ho*Wo) output, channels already double-shuffled.
    """
    x_taps = x_taps_ref[...]

    # Right branch stage 1: 1x1 conv (+BN) + ReLU applied to every tap at once.
    r_taps = jnp.maximum(
        jnp.dot(w_bd_ref[...], x_taps, preferred_element_type=jnp.float32)
        + b_r1_ref[...], 0.0)

    # Both branch tails (dw3x3/s2 -> 1x1, BN folded) + concat + double shuffle
    # as matmuls over the stacked-tap contraction dim, plus the rank-9
    # correction that removes the right branch's spurious padded-ring term.
    y = (jnp.dot(w_x_ref[...], x_taps, preferred_element_type=jnp.float32)
         + jnp.dot(w_r_ref[...], r_taps, preferred_element_type=jnp.float32)
         + jnp.dot(w_pad_ref[...], pad_ref[...],
                   preferred_element_type=jnp.float32)
         + b_out_ref[...])
    o_ref[...] = jnp.maximum(y, 0.0).astype(o_ref.dtype)


# ----------------------------- host-side helpers ----------------------------

def _fold_bn(bnp):
    gamma, beta, mean, var = bnp
    scale = gamma / jnp.sqrt(var + BN_EPS)
    return scale, beta - mean * scale


def _dw_weight_to_9c(w_oihw):
    # torch depthwise weight [C, 1, 3, 3] -> [9, C], row index k = ky*3 + kx
    return jnp.transpose(w_oihw[:, 0], (1, 2, 0)).reshape(9, -1)


# ----------------------------- DSampling forward -----------------------------

def dsampling_pallas(x_nchw, params, groups=2):
    N, C, H, W = x_nchw.shape
    Ho = (H - 1) // 2 + 1
    Wo = (W - 1) // 2 + 1
    M = Ho * Wo
    C2, K = 2 * C, 9 * C

    x = x_nchw.astype(jnp.float32)

    # ---- stacked stride-2 taps of the zero-padded input (channels-first) ----
    # Single extra HBM pass; no NCHW<->NHWC transposes anywhere.
    Hp, Wp = 2 * Ho + 1, 2 * Wo + 1
    xp = jnp.pad(x, ((0, 0), (0, 0), (1, Hp - H - 1), (1, Wp - W - 1)))
    taps = [xp[:, :, ky:ky + 2 * Ho - 1:2, kx:kx + 2 * Wo - 1:2]
            for ky in range(3) for kx in range(3)]
    x_taps = jnp.stack(taps, axis=1).reshape(N, K, M)   # contiguous merges only

    # pad indicator: 1.0 where tap k at output position m reads a padded pixel
    ho = np.arange(Ho)
    wo = np.arange(Wo)
    pad_np = np.zeros((9, Ho, Wo), np.float32)
    for ky in range(3):
        for kx in range(3):
            rp = (2 * ho + ky < 1) | (2 * ho + ky > H)
            cp = (2 * wo + kx < 1) | (2 * wo + kx > W)
            pad_np[ky * 3 + kx] = (rp[:, None] | cp[None, :]).astype(np.float32)
    pad_ind = jnp.asarray(pad_np.reshape(9, M))

    # ---- fold BN into weights / biases --------------------------------------
    s_dl1, t_dl1 = _fold_bn(params["dw_l1_bn"])
    s_pl2, t_pl2 = _fold_bn(params["pw_l2_bn"])
    s_pr1, t_pr1 = _fold_bn(params["pw_r1_bn"])
    s_dr2, t_dr2 = _fold_bn(params["dw_r2_bn"])
    s_pr3, t_pr3 = _fold_bn(params["pw_r3_bn"])

    w_dw_l = _dw_weight_to_9c(params["dw_l1_w"])               # (9, C)
    w_dw_r = _dw_weight_to_9c(params["dw_r2_w"])               # (9, C)
    w_r1 = params["pw_r1_w"][:, :, 0, 0] * s_pr1[:, None]      # (C, C) [out, in]
    w_l2 = params["pw_l2_w"][:, :, 0, 0] * s_pl2[:, None]
    w_r3 = params["pw_r3_w"][:, :, 0, 0] * s_pr3[:, None]

    # dw + pw fold: A[o, k*C + c] = w_pw[o, c] * s_dw[c] * w_dw[k, c]
    A_l = ((w_l2 * s_dl1[None, :])[:, None, :] * w_dw_l[None, :, :]).reshape(C, K)
    A_r = ((w_r3 * s_dr2[None, :])[:, None, :] * w_dw_r[None, :, :]).reshape(C, K)
    b_l = w_l2 @ t_dl1 + t_pl2                                 # (C,)
    b_r = w_r3 @ t_dr2 + t_pr3                                 # (C,)

    # conv_r1 applied tap-wise with one matmul: block-diag weight + tiled bias.
    # TODO(synk): for large C replace the block-diag matmul with 9 per-tap dots
    # (block-diag wastes MACs; irrelevant at these channel counts).
    w_bd = jnp.kron(jnp.eye(9, dtype=jnp.float32), w_r1)       # (9C, 9C)
    b_r1_rep = jnp.tile(t_pr1, 9)[:, None]                     # (9C, 1)

    # padded-ring correction: unmasked r_taps equal relu(t_pr1) at padding.
    w_pad = -(A_r.reshape(C, 9, C) @ jnp.maximum(t_pr1, 0.0))  # (C, 9)

    # concat + double channel shuffle folded into a ROW permutation.
    if C2 % groups == 0:
        p = np.arange(C2).reshape(groups, C2 // groups).T.reshape(-1)
        q = p[p]                                                # shuffle twice
    else:
        q = np.arange(C2)
    sel_left = (q < C)[:, None]
    A_full = jnp.concatenate([A_l, A_r], axis=0)[q]             # (2C, 9C)
    w_x = jnp.where(sel_left, A_full, 0.0)
    w_r = jnp.where(sel_left, 0.0, A_full)
    w_pad_full = jnp.concatenate([jnp.zeros((C, 9), jnp.float32), w_pad], 0)[q]
    b_out = jnp.concatenate([b_l, b_r])[q][:, None]             # (2C, 1)

    def const(shape):
        return pl.BlockSpec(shape, lambda n: tuple(0 for _ in shape))

    out = pl.pallas_call(
        _dsampling_kernel,
        out_shape=jax.ShapeDtypeStruct((N, C2, M), jnp.float32),
        grid=(N,),
        in_specs=[
            pl.BlockSpec((None, K, M), lambda n: (n, 0, 0)),    # x_taps
            const((9, M)),                                      # pad indicator
            const((K, K)),                                      # w_bd (conv_r1)
            const((K, 1)),                                      # b_r1
            const((C2, K)),                                     # w_x (left)
            const((C2, K)),                                     # w_r (right)
            const((C2, 9)),                                     # w_pad
            const((C2, 1)),                                     # b_out
        ],
        out_specs=pl.BlockSpec((None, C2, M), lambda n: (n, 0, 0)),
        compiler_params=pltpu.CompilerParams(
            dimension_semantics=("parallel",)),
    )(x_taps, pad_ind, w_bd, b_r1_rep, w_x, w_r, w_pad_full, b_out)

    # Contiguous split of the spatial dim — stays NCHW, no transpose.
    return out.reshape(N, C2, Ho, Wo)


# ------------------------- pure-JAX reference (NCHW) -------------------------

def shuffle_chnls_nchw(x, groups=2):
    N, C, H, W = x.shape
    if C % groups:
        return x
    x = x.reshape(N, groups, C // groups, H, W)
    x = jnp.swapaxes(x, 1, 2)
    return x.reshape(N, C, H, W)


def dsampling_ref(x, params, groups=2):
    def bn_apply(y, bnp):
        gamma, beta, mean, var = bnp
        inv = 1.0 / jnp.sqrt(var + BN_EPS)
        return (y - mean[None, :, None, None]) * inv[None, :, None, None] \
               * gamma[None, :, None, None] + beta[None, :, None, None]

    def dwconv(y, w):
        return lax.conv_general_dilated(
            y, w, (2, 2), ((1, 1), (1, 1)), feature_group_count=y.shape[1],
            dimension_numbers=("NCHW", "OIHW", "NCHW"),
            precision=lax.Precision.HIGHEST)

    def pwconv(y, w):
        return lax.conv_general_dilated(
            y, w, (1, 1), ((0, 0), (0, 0)),
            dimension_numbers=("NCHW", "OIHW", "NCHW"),
            precision=lax.Precision.HIGHEST)

    relu = lambda y: jnp.maximum(y, 0.0)

    out_l = bn_apply(dwconv(x, params["dw_l1_w"]), params["dw_l1_bn"])
    out_l = relu(bn_apply(pwconv(out_l, params["pw_l2_w"]), params["pw_l2_bn"]))
    out_r = relu(bn_apply(pwconv(x, params["pw_r1_w"]), params["pw_r1_bn"]))
    out_r = bn_apply(dwconv(out_r, params["dw_r2_w"]), params["dw_r2_bn"])
    out_r = relu(bn_apply(pwconv(out_r, params["pw_r3_w"]), params["pw_r3_bn"]))
    out = jnp.concatenate([out_l, out_r], axis=1)
    out = shuffle_chnls_nchw(out, groups)
    return shuffle_chnls_nchw(out, groups)


# --------------------------------- params ------------------------------------

def init_params(key, C):
    ks = jax.random.split(key, 10)

    def bn(k):
        k1, k2, k3, k4 = jax.random.split(k, 4)
        gamma = 1.0 + 0.1 * jax.random.normal(k1, (C,), jnp.float32)
        beta = 0.1 * jax.random.normal(k2, (C,), jnp.float32)
        mean = 0.1 * jax.random.normal(k3, (C,), jnp.float32)
        var = 1.0 + 0.1 * jnp.abs(jax.random.normal(k4, (C,), jnp.float32))
        return gamma, beta, mean, var

    p = {}
    p["dw_l1_w"] = 0.3 * jax.random.normal(ks[0], (C, 1, 3, 3), jnp.float32)
    p["dw_l1_bn"] = bn(ks[1])
    p["pw_l2_w"] = 0.3 * jax.random.normal(ks[2], (C, C, 1, 1), jnp.float32)
    p["pw_l2_bn"] = bn(ks[3])
    p["pw_r1_w"] = 0.3 * jax.random.normal(ks[4], (C, C, 1, 1), jnp.float32)
    p["pw_r1_bn"] = bn(ks[5])
    p["dw_r2_w"] = 0.3 * jax.random.normal(ks[6], (C, 1, 3, 3), jnp.float32)
    p["dw_r2_bn"] = bn(ks[7])
    p["pw_r3_w"] = 0.3 * jax.random.normal(ks[8], (C, C, 1, 1), jnp.float32)
    p["pw_r3_bn"] = bn(ks[9])
    return p


# ---------------------------------- main --------------------------------------

if __name__ == "__main__":
    key = jax.random.PRNGKey(0)
    kx, kp = jax.random.split(key)

    N, C, H, W = 2, 4, 16, 16                 # in_chnls=4
    x = jax.random.normal(kx, (N, C, H, W), jnp.float32)
    params = init_params(kp, C)

    out = jax.block_until_ready(dsampling_pallas(x, params, groups=2))
    assert out.shape == (N, 2 * C, H // 2, W // 2), out.shape

    ref = dsampling_ref(x, params, groups=2)
    np.testing.assert_allclose(np.asarray(out), np.asarray(ref),
                               rtol=1e-4, atol=1e-4)
    print("KERNEL_OK")
</pallas_src>

<mosaic_0001>
module attributes {stable_mosaic.version = 11 : i64} {
  func.func @_dsampling_kernel(%arg0: i32, %arg1: memref<1x36x64xf32, #tpu.memory_space<vmem>>, %arg2: memref<9x64xf32, #tpu.memory_space<vmem>>, %arg3: memref<36x36xf32, #tpu.memory_space<vmem>>, %arg4: memref<36x1xf32, #tpu.memory_space<vmem>>, %arg5: memref<8x36xf32, #tpu.memory_space<vmem>>, %arg6: memref<8x36xf32, #tpu.memory_space<vmem>>, %arg7: memref<8x9xf32, #tpu.memory_space<vmem>>, %arg8: memref<8x1xf32, #tpu.memory_space<vmem>>, %arg9: memref<1x8x64xf32, #tpu.memory_space<vmem>>) attributes {dimension_semantics = [#tpu.dimension_semantics<parallel>], iteration_bounds = array<i64: 2>, scalar_prefetch = 0 : i64, scratch_operands = 0 : i64, tpu.core_type = #tpu.core_type<tc>, window_params = [{transform_indices = @transform_0, window_bounds = array<i64: 1, 36, 64>}, {pipeline_mode = #tpu.pipeline_mode<synchronous>, transform_indices = @transform_1, window_bounds = array<i64: 9, 64>}, {pipeline_mode = #tpu.pipeline_mode<synchronous>, transform_indices = @transform_2, window_bounds = array<i64: 36, 36>}, {pipeline_mode = #tpu.pipeline_mode<synchronous>, transform_indices = @transform_3, window_bounds = array<i64: 36, 1>}, {pipeline_mode = #tpu.pipeline_mode<synchronous>, transform_indices = @transform_4, window_bounds = array<i64: 8, 36>}, {pipeline_mode = #tpu.pipeline_mode<synchronous>, transform_indices = @transform_5, window_bounds = array<i64: 8, 36>}, {pipeline_mode = #tpu.pipeline_mode<synchronous>, transform_indices = @transform_6, window_bounds = array<i64: 8, 9>}, {pipeline_mode = #tpu.pipeline_mode<synchronous>, transform_indices = @transform_7, window_bounds = array<i64: 8, 1>}, {transform_indices = @transform_8, window_bounds = array<i64: 1, 8, 64>}]} {
    %c0 = arith.constant 0 : index
    %c0_0 = arith.constant 0 : index
    %c0_1 = arith.constant 0 : index
    %0 = vector.load %arg1[%c0, %c0_0, %c0_1] : memref<1x36x64xf32, #tpu.memory_space<vmem>>, vector<1x36x64xf32>
    %1 = vector.shape_cast %0 : vector<1x36x64xf32> to vector<36x64xf32>
    %c0_2 = arith.constant 0 : index
    %c0_3 = arith.constant 0 : index
    %2 = vector.load %arg3[%c0_2, %c0_3] : memref<36x36xf32, #tpu.memory_space<vmem>>, vector<36x36xf32>
    %cst = arith.constant dense<0.000000e+00> : vector<36x64xf32>
    %3 = tpu.matmul %2, %1, %cst {dimension_numbers = #tpu.dot_dimension_numbers<[1], [0], [0], [1], [0, 0, 1, 1], [], []>} : vector<36x36xf32>, vector<36x64xf32>, vector<36x64xf32> -> vector<36x64xf32>
    %c0_4 = arith.constant 0 : index
    %c0_5 = arith.constant 0 : index
    %4 = vector.load %arg4[%c0_4, %c0_5] : memref<36x1xf32, #tpu.memory_space<vmem>>, vector<36x1xf32>
    %5 = vector.broadcast %4 : vector<36x1xf32> to vector<36x64xf32>
    %6 = arith.addf %3, %5 : vector<36x64xf32>
    %cst_6 = arith.constant 0.000000e+00 : f32
    %7 = vector.broadcast %cst_6 : f32 to vector<36x64xf32>
    %8 = arith.maximumf %6, %7 : vector<36x64xf32>
    %c0_7 = arith.constant 0 : index
    %c0_8 = arith.constant 0 : index
    %9 = vector.load %arg5[%c0_7, %c0_8] : memref<8x36xf32, #tpu.memory_space<vmem>>, vector<8x36xf32>
    %cst_9 = arith.constant dense<0.000000e+00> : vector<8x64xf32>
    %10 = tpu.matmul %9, %1, %cst_9 {dimension_numbers = #tpu.dot_dimension_numbers<[1], [0], [0], [1], [0, 0, 1, 1], [], []>} : vector<8x36xf32>, vector<36x64xf32>, vector<8x64xf32> -> vector<8x64xf32>
    %c0_10 = arith.constant 0 : index
    %c0_11 = arith.constant 0 : index
    %11 = vector.load %arg6[%c0_10, %c0_11] : memref<8x36xf32, #tpu.memory_space<vmem>>, vector<8x36xf32>
    %cst_12 = arith.constant dense<0.000000e+00> : vector<8x64xf32>
    %12 = tpu.matmul %11, %8, %cst_12 {dimension_numbers = #tpu.dot_dimension_numbers<[1], [0], [0], [1], [0, 0, 1, 1], [], []>} : vector<8x36xf32>, vector<36x64xf32>, vector<8x64xf32> -> vector<8x64xf32>
    %13 = arith.addf %10, %12 : vector<8x64xf32>
    %c0_13 = arith.constant 0 : index
    %c0_14 = arith.constant 0 : index
    %14 = vector.load %arg7[%c0_13, %c0_14] : memref<8x9xf32, #tpu.memory_space<vmem>>, vector<8x9xf32>
    %c0_15 = arith.constant 0 : index
    %c0_16 = arith.constant 0 : index
    %15 = vector.load %arg2[%c0_15, %c0_16] : memref<9x64xf32, #tpu.memory_space<vmem>>, vector<9x64xf32>
    %cst_17 = arith.constant dense<0.000000e+00> : vector<8x64xf32>
    %16 = tpu.matmul %14, %15, %cst_17 {dimension_numbers = #tpu.dot_dimension_numbers<[1], [0], [0], [1], [0, 0, 1, 1], [], []>} : vector<8x9xf32>, vector<9x64xf32>, vector<8x64xf32> -> vector<8x64xf32>
    %17 = arith.addf %13, %16 : vector<8x64xf32>
    %c0_18 = arith.constant 0 : index
    %c0_19 = arith.constant 0 : index
    %18 = vector.load %arg8[%c0_18, %c0_19] : memref<8x1xf32, #tpu.memory_space<vmem>>, vector<8x1xf32>
    %19 = vector.broadcast %18 : vector<8x1xf32> to vector<8x64xf32>
    %20 = arith.addf %17, %19 : vector<8x64xf32>
    %cst_20 = arith.constant 0.000000e+00 : f32
    %21 = vector.broadcast %cst_20 : f32 to vector<8x64xf32>
    %22 = arith.maximumf %20, %21 : vector<8x64xf32>
    %c0_21 = arith.constant 0 : index
    %c0_22 = arith.constant 0 : index
    %c0_23 = arith.constant 0 : index
    %23 = vector.load %arg9[%c0_21, %c0_22, %c0_23] : memref<1x8x64xf32, #tpu.memory_space<vmem>>, vector<1x8x64xf32>
    %24 = vector.shape_cast %23 : vector<1x8x64xf32> to vector<8x64xf32>
    %25 = vector.shape_cast %22 : vector<8x64xf32> to vector<1x8x64xf32>
    tpu.vector_store %arg9[%c0_21, %c0_22, %c0_23], %25 {strides = array<i32>} : memref<1x8x64xf32, #tpu.memory_space<vmem>>, vector<1x8x64xf32>,
    return
  }
  func.func @transform_0(%arg0: i32) -> (i32, i32, i32) {
    %c0_i32 = arith.constant 0 : i32
    %c0_i32_0 = arith.constant 0 : i32
    %c0_i32_1 = arith.constant 0 : i32
    return %arg0, %c0_i32, %c0_i32_0 : i32, i32, i32
  }
  func.func @transform_1(%arg0: i32) -> (i32, i32) {
    %c0_i32 = arith.constant 0 : i32
    %c0_i32_0 = arith.constant 0 : i32
    %c0_i32_1 = arith.constant 0 : i32
    return %c0_i32, %c0_i32_0 : i32, i32
  }
  func.func @transform_2(%arg0: i32) -> (i32, i32) {
    %c0_i32 = arith.constant 0 : i32
    %c0_i32_0 = arith.constant 0 : i32
    %c0_i32_1 = arith.constant 0 : i32
    return %c0_i32, %c0_i32_0 : i32, i32
  }
  func.func @transform_3(%arg0: i32) -> (i32, i32) {
    %c0_i32 = arith.constant 0 : i32
    %c0_i32_0 = arith.constant 0 : i32
    %c0_i32_1 = arith.constant 0 : i32
    return %c0_i32, %c0_i32_0 : i32, i32
  }
  func.func @transform_4(%arg0: i32) -> (i32, i32) {
    %c0_i32 = arith.constant 0 : i32
    %c0_i32_0 = arith.constant 0 : i32
    %c0_i32_1 = arith.constant 0 : i32
    return %c0_i32, %c0_i32_0 : i32, i32
  }
  func.func @transform_5(%arg0: i32) -> (i32, i32) {
    %c0_i32 = arith.constant 0 : i32
    %c0_i32_0 = arith.constant 0 : i32
    %c0_i32_1 = arith.constant 0 : i32
    return %c0_i32, %c0_i32_0 : i32, i32
  }
  func.func @transform_6(%arg0: i32) -> (i32, i32) {
    %c0_i32 = arith.constant 0 : i32
    %c0_i32_0 = arith.constant 0 : i32
    %c0_i32_1 = arith.constant 0 : i32
    return %c0_i32, %c0_i32_0 : i32, i32
  }
  func.func @transform_7(%arg0: i32) -> (i32, i32) {
    %c0_i32 = arith.constant 0 : i32
    %c0_i32_0 = arith.constant 0 : i32
    %c0_i32_1 = arith.constant 0 : i32
    return %c0_i32, %c0_i32_0 : i32, i32
  }
  func.func @transform_8(%arg0: i32) -> (i32, i32, i32) {
    %c0_i32 = arith.constant 0 : i32
    %c0_i32_0 = arith.constant 0 : i32
    %c0_i32_1 = arith.constant 0 : i32
    return %arg0, %c0_i32, %c0_i32_0 : i32, i32, i32
  }
}

</mosaic_0001>

<llo_original>
// kernel: tpu_custom_call.1
$region0: #{tpu_custom_call.1}
  #allocation0 [shape = 'u32[]', space=smem, size = 0x4, offset = 0x4, fixed_abs, tag = 'smem constant byte address 0x4 - core index']
  #allocation1 [shape = 'u32[72,128]{1,0:T(1,128)}', space=vmem, size = 0x9000, scoped, tag = 'internal scratch']
  %s0 = inlined_call_operand.vmem [shape: f32[2,36,64], index: 0, kind: input, shape index: {}]
  %s1 = inlined_call_operand.vmem [shape: f32[9,64], index: 1, kind: input, shape index: {}]
  %s2 = inlined_call_operand.vmem [shape: f32[36,36], index: 2, kind: input, shape index: {}]
  %s3 = inlined_call_operand.vmem [shape: f32[36,1], index: 3, kind: input, shape index: {}]
  %s4 = inlined_call_operand.vmem [shape: f32[8,36], index: 4, kind: input, shape index: {}]
  %s5 = inlined_call_operand.vmem [shape: f32[8,36], index: 5, kind: input, shape index: {}]
  %s6 = inlined_call_operand.vmem [shape: f32[8,9], index: 6, kind: input, shape index: {}]
  %s7 = inlined_call_operand.vmem [shape: f32[8,1], index: 7, kind: input, shape index: {}]
  %s8 = inlined_call_operand.hbm [shape: f32[2,8,64], index: 8, kind: output, shape index: {}]
  %s9 = sld [smem:[#allocation0]]
  $region65: #{tpu_custom_call.1} parent=0
    _
  %s11 = ssub.s32 1, %s9
  %s12 = scalar_select 0, %s11, %s9
  $region1: #{tpu_custom_call.1} parent=0
    #allocation2 [shape = 'u8[8192]{0}', space=vmem, size = 0x2000, scoped, tag = 'output window, operand 0']
    #allocation3 [shape = 's32[2]{0}', space=sflag, size = 0x8, scoped, tag = 'scoped memory for tpu_custom_call.1']
    %13 = vsyncpa [#allocation3], 0
    %s14 = scalar_lea.sflag [#allocation3], 1
    %15 = vsyncpa %s14, 0
    loop: start=0, step=1, limit=4
    $region2: #{tpu_custom_call.1} parent=1 // loop_pre_header
      _
    $region3: #{tpu_custom_call.1} parent=1 // loop_header
      %s17 = sphi 0, %s21
      %p18 = scmp.ge.s32.totalorder %s17, 4
      %s27 = sphi 0, %s29
      %s30 = sphi 0, %s27
      %s31 = sphi 0, %s30
      %s47 = sphi 0, %s31
      %s51 = sphi 0, %s51
      %s53 = sphi 0, %s51
      %s54 = sphi 0, %s53
      %s68 = sphi 0, %s54
      %s72 = sphi 0, %s72
      %s74 = sphi 0, %s72
      %s75 = sphi 0, %s74
      %s89 = sphi 0, %s75
      %s93 = sphi 0, %s93
      %s95 = sphi 0, %s93
      %s96 = sphi 0, %s95
      %s110 = sphi 0, %s96
      %s114 = sphi 0, %s114
      %s116 = sphi 0, %s114
      %s117 = sphi 0, %s116
      %s131 = sphi 0, %s117
      %s135 = sphi 0, %s135
      %s137 = sphi 0, %s135
      %s138 = sphi 0, %s137
      %s152 = sphi 0, %s138
      %s156 = sphi 0, %s156
      %s158 = sphi 0, %s156
      %s159 = sphi 0, %s158
      %s173 = sphi 0, %s159
      %s177 = sphi 0, %s177
      %s179 = sphi 0, %s177
      %s180 = sphi 0, %s179
      %s194 = sphi 0, %s180
      %s200 = sphi 0, %s202
      %s203 = sphi 0, %s200
      %s204 = sphi 0, %s203
      %s220 = sphi 0, %s204
    $region4: #{tpu_custom_call.1} parent=1 // loop_header_branch
      %20 = sbr.rel (%p18) target = $region8
    $region5: #{tpu_custom_call.1} parent=1 // loop_body
      %s22 = ssub.s32 %s17, 1
      %s23 = ssub.s32 %s17, 2
      %s24 = sadd.s32 %s17, 1
      %s25 = ssub.s32 %s17, %s24
      %p26 = scmp.eq.s32.totalorder %s25, 0
      %s28 = sadd.s32 %s27, 1
      %s29 = scalar_select %p26, %s27, %s28
      %p32 = pneg %p26
      %p33 = scmp.eq.s32.totalorder %s17, 1
      %p34 = por %p32, %p33
      %p35 = scmp.ne.s32.totalorder %s27, %s30
      %p36 = scmp.eq.s32.totalorder %s17, 0
      %p37 = por %p35, %p36
      %p38 = scmp.ne.s32.totalorder %s27, %s30
      %p39 = scmp.eq.s32.totalorder %s22, 1
      %p40 = por %p38, %p39
      %p41 = scmp.ne.s32.totalorder %s30, %s31
      %p42 = scmp.eq.s32.totalorder %s22, 0
      %p43 = por %p41, %p42
      %p44 = scmp.ne.s32.totalorder %s30, %s31
      %p45 = scmp.eq.s32.totalorder %s23, 1
      %p46 = por %p44, %p45
      %p48 = scmp.ne.s32.totalorder %s31, %s47
      %p49 = scmp.eq.s32.totalorder %s23, 0
      %p50 = por %p48, %p49
      %s52 = sadd.s32 %s51, 1
      %p55 = scmp.eq.s32.totalorder %s17, 1
      %p56 = scmp.ne.s32.totalorder %s51, %s53
      %p57 = scmp.eq.s32.totalorder %s17, 0
      %p58 = por %p56, %p57
      %p59 = scmp.ne.s32.totalorder %s51, %s53
      %p60 = scmp.eq.s32.totalorder %s22, 1
      %p61 = por %p59, %p60
      %p62 = scmp.ne.s32.totalorder %s53, %s54
      %p63 = scmp.eq.s32.totalorder %s22, 0
      %p64 = por %p62, %p63
      %p65 = scmp.ne.s32.totalorder %s53, %s54
      %p66 = scmp.eq.s32.totalorder %s23, 1
      %p67 = por %p65, %p66
      %p69 = scmp.ne.s32.totalorder %s54, %s68
      %p70 = scmp.eq.s32.totalorder %s23, 0
      %p71 = por %p69, %p70
      %s73 = sadd.s32 %s72, 1
      %p76 = scmp.eq.s32.totalorder %s17, 1
      %p77 = scmp.ne.s32.totalorder %s72, %s74
      %p78 = scmp.eq.s32.totalorder %s17, 0
      %p79 = por %p77, %p78
      %p80 = scmp.ne.s32.totalorder %s72, %s74
      %p81 = scmp.eq.s32.totalorder %s22, 1
      %p82 = por %p80, %p81
      %p83 = scmp.ne.s32.totalorder %s74, %s75
      %p84 = scmp.eq.s32.totalorder %s22, 0
      %p85 = por %p83, %p84
      %p86 = scmp.ne.s32.totalorder %s74, %s75
      %p87 = scmp.eq.s32.totalorder %s23, 1
      %p88 = por %p86, %p87
      %p90 = scmp.ne.s32.totalorder %s75, %s89
      %p91 = scmp.eq.s32.totalorder %s23, 0
      %p92 = por %p90, %p91
      %s94 = sadd.s32 %s93, 1
      %p97 = scmp.eq.s32.totalorder %s17, 1
      %p98 = scmp.ne.s32.totalorder %s93, %s95
      %p99 = scmp.eq.s32.totalorder %s17, 0
      %p100 = por %p98, %p99
      %p101 = scmp.ne.s32.totalorder %s93, %s95
      %p102 = scmp.eq.s32.totalorder %s22, 1
      %p103 = por %p101, %p102
      %p104 = scmp.ne.s32.totalorder %s95, %s96
      %p105 = scmp.eq.s32.totalorder %s22, 0
      %p106 = por %p104, %p105
      %p107 = scmp.ne.s32.totalorder %s95, %s96
      %p108 = scmp.eq.s32.totalorder %s23, 1
      %p109 = por %p107, %p108
      %p111 = scmp.ne.s32.totalorder %s96, %s110
      %p112 = scmp.eq.s32.totalorder %s23, 0
      %p113 = por %p111, %p112
      %s115 = sadd.s32 %s114, 1
      %p118 = scmp.eq.s32.totalorder %s17, 1
      %p119 = scmp.ne.s32.totalorder %s114, %s116
      %p120 = scmp.eq.s32.totalorder %s17, 0
      %p121 = por %p119, %p120
      %p122 = scmp.ne.s32.totalorder %s114, %s116
      %p123 = scmp.eq.s32.totalorder %s22, 1
      %p124 = por %p122, %p123
      %p125 = scmp.ne.s32.totalorder %s116, %s117
      %p126 = scmp.eq.s32.totalorder %s22, 0
      %p127 = por %p125, %p126
      %p128 = scmp.ne.s32.totalorder %s116, %s117
      %p129 = scmp.eq.s32.totalorder %s23, 1
      %p130 = por %p128, %p129
      %p132 = scmp.ne.s32.totalorder %s117, %s131
      %p133 = scmp.eq.s32.totalorder %s23, 0
      %p134 = por %p132, %p133
      %s136 = sadd.s32 %s135, 1
      %p139 = scmp.eq.s32.totalorder %s17, 1
      %p140 = scmp.ne.s32.totalorder %s135, %s137
      %p141 = scmp.eq.s32.totalorder %s17, 0
      %p142 = por %p140, %p141
      %p143 = scmp.ne.s32.totalorder %s135, %s137
      %p144 = scmp.eq.s32.totalorder %s22, 1
      %p145 = por %p143, %p144
      %p146 = scmp.ne.s32.totalorder %s137, %s138
      %p147 = scmp.eq.s32.totalorder %s22, 0
      %p148 = por %p146, %p147
      %p149 = scmp.ne.s32.totalorder %s137, %s138
      %p150 = scmp.eq.s32.totalorder %s23, 1
      %p151 = por %p149, %p150
      %p153 = scmp.ne.s32.totalorder %s138, %s152
      %p154 = scmp.eq.s32.totalorder %s23, 0
      %p155 = por %p153, %p154
      %s157 = sadd.s32 %s156, 1
      %p160 = scmp.eq.s32.totalorder %s17, 1
      %p161 = scmp.ne.s32.totalorder %s156, %s158
      %p162 = scmp.eq.s32.totalorder %s17, 0
      %p163 = por %p161, %p162
      %p164 = scmp.ne.s32.totalorder %s156, %s158
      %p165 = scmp.eq.s32.totalorder %s22, 1
      %p166 = por %p164, %p165
      %p167 = scmp.ne.s32.totalorder %s158, %s159
      %p168 = scmp.eq.s32.totalorder %s22, 0
      %p169 = por %p167, %p168
      %p170 = scmp.ne.s32.totalorder %s158, %s159
      %p171 = scmp.eq.s32.totalorder %s23, 1
      %p172 = por %p170, %p171
      %p174 = scmp.ne.s32.totalorder %s159, %s173
      %p175 = scmp.eq.s32.totalorder %s23, 0
      %p176 = por %p174, %p175
      %s178 = sadd.s32 %s177, 1
      %p181 = scmp.eq.s32.totalorder %s17, 1
      %p182 = scmp.ne.s32.totalorder %s177, %s179
      %p183 = scmp.eq.s32.totalorder %s17, 0
      %p184 = por %p182, %p183
      %p185 = scmp.ne.s32.totalorder %s177, %s179
      %p186 = scmp.eq.s32.totalorder %s22, 1
      %p187 = por %p185, %p186
      %p188 = scmp.ne.s32.totalorder %s179, %s180
      %p189 = scmp.eq.s32.totalorder %s22, 0
      %p190 = por %p188, %p189
      %p191 = scmp.ne.s32.totalorder %s179, %s180
      %p192 = scmp.eq.s32.totalorder %s23, 1
      %p193 = por %p191, %p192
      %p195 = scmp.ne.s32.totalorder %s180, %s194
      %p196 = scmp.eq.s32.totalorder %s23, 0
      %p197 = por %p195, %p196
      %s198 = ssub.s32 %s17, %s24
      %p199 = scmp.eq.s32.totalorder %s198, 0
      %s201 = sadd.s32 %s200, 1
      %s202 = scalar_select %p199, %s200, %s201
      %p205 = pneg %p199
      %p206 = scmp.eq.s32.totalorder %s17, 1
      %p207 = por %p205, %p206
      %p208 = scmp.ne.s32.totalorder %s200, %s203
      %p209 = scmp.eq.s32.totalorder %s17, 0
      %p210 = por %p208, %p209
      %p211 = scmp.ne.s32.totalorder %s200, %s203
      %p212 = scmp.eq.s32.totalorder %s22, 1
      %p213 = por %p211, %p212
      %p214 = scmp.ne.s32.totalorder %s203, %s204
      %p215 = scmp.eq.s32.totalorder %s22, 0
      %p216 = por %p214, %p215
      %p217 = scmp.ne.s32.totalorder %s203, %s204
      %p218 = scmp.eq.s32.totalorder %s23, 1
      %p219 = por %p217, %p218
      %p221 = scmp.ne.s32.totalorder %s204, %s220
      %p222 = scmp.eq.s32.totalorder %s23, 0
      %p223 = por %p221, %p222
      %p224 = scmp.le.s32.totalorder 1, %s17
      %p225 = scmp.lt.s32.totalorder %s17, 3
      %p226 = pnand %p224, %p225
      %p227 = pneg %p226
      // Predicated region
      $region9: #{tpu_custom_call.1} parent=5 // pred_check
        _
      $region10: #{tpu_custom_call.1} parent=5 // pred_check_branch
        %229 = sbr.rel (%p226) target = $region12
      $region11: #{tpu_custom_call.1} parent=5 // pred_region
        %s230 = ssub.s32 %s17, 1
        // Predicated region
        $region13: #{tpu_custom_call.1} parent=11 // pred_check
          %p231 = pneg %p64
        $region14: #{tpu_custom_call.1} parent=11 // pred_check_branch
          %233 = sbr.rel (%p231) target = $region16
        $region15: #{tpu_custom_call.1} parent=11 // pred_region
          _
        $region16: #{tpu_custom_call.1} parent=11 // pred_fallthru
          _
        // Predicated region
        $region17: #{tpu_custom_call.1} parent=11 // pred_check
          %p234 = pneg %p85
        $region18: #{tpu_custom_call.1} parent=11 // pred_check_branch
          %236 = sbr.rel (%p234) target = $region20
        $region19: #{tpu_custom_call.1} parent=11 // pred_region
          _
        $region20: #{tpu_custom_call.1} parent=11 // pred_fallthru
          _
        // Predicated region
        $region21: #{tpu_custom_call.1} parent=11 // pred_check
          %p237 = pneg %p106
        $region22: #{tpu_custom_call.1} parent=11 // pred_check_branch
          %239 = sbr.rel (%p237) target = $region24
        $region23: #{tpu_custom_call.1} parent=11 // pred_region
          _
        $region24: #{tpu_custom_call.1} parent=11 // pred_fallthru
          _
        // Predicated region
        $region25: #{tpu_custom_call.1} parent=11 // pred_check
          %p240 = pneg %p127
        $region26: #{tpu_custom_call.1} parent=11 // pred_check_branch
          %242 = sbr.rel (%p240) target = $region28
        $region27: #{tpu_custom_call.1} parent=11 // pred_region
          _
        $region28: #{tpu_custom_call.1} parent=11 // pred_fallthru
          _
        // Predicated region
        $region29: #{tpu_custom_call.1} parent=11 // pred_check
          %p243 = pneg %p148
        $region30: #{tpu_custom_call.1} parent=11 // pred_check_branch
          %245 = sbr.rel (%p243) target = $region32
        $region31: #{tpu_custom_call.1} parent=11 // pred_region
          _
        $region32: #{tpu_custom_call.1} parent=11 // pred_fallthru
          _
        // Predicated region
        $region33: #{tpu_custom_call.1} parent=11 // pred_check
          %p246 = pneg %p169
        $region34: #{tpu_custom_call.1} parent=11 // pred_check_branch
          %248 = sbr.rel (%p246) target = $region36
        $region35: #{tpu_custom_call.1} parent=11 // pred_region
          _
        $region36: #{tpu_custom_call.1} parent=11 // pred_fallthru
          _
        // Predicated region
        $region37: #{tpu_custom_call.1} parent=11 // pred_check
          %p249 = pneg %p190
        $region38: #{tpu_custom_call.1} parent=11 // pred_check_branch
          %251 = sbr.rel (%p249) target = $region40
        $region39: #{tpu_custom_call.1} parent=11 // pred_region
          _
        $region40: #{tpu_custom_call.1} parent=11 // pred_fallthru
          _
      $region12: #{tpu_custom_call.1} parent=5 // pred_fallthru
        _
      %p252 = scmp.lt.s32.totalorder %s17, 2
      // Predicated region
      $region41: #{tpu_custom_call.1} parent=5 // pred_check
        %p253 = pneg %p252
      $region42: #{tpu_custom_call.1} parent=5 // pred_check_branch
        %255 = sbr.rel (%p253) target = $region44
      $region43: #{tpu_custom_call.1} parent=5 // pred_region
        // Predicated region
        $region45: #{tpu_custom_call.1} parent=43 // pred_check
          %p256 = pneg %p37
        $region46: #{tpu_custom_call.1} parent=43 // pred_check_branch
          %258 = sbr.rel (%p256) target = $region48
        $region47: #{tpu_custom_call.1} parent=43 // pred_region
          %p259 = scmp.lt.s32.totalorder %s17, 1
          %s260 = scalar_select %p259, %s17, 1
          %s261 = smul.addr %s260, 5
          %s262 = smul.addr %s261, 8
          %s263 = scalar_lea.vmem %s0, %s262
        $region48: #{tpu_custom_call.1} parent=43 // pred_fallthru
          _
      $region44: #{tpu_custom_call.1} parent=5 // pred_fallthru
        _
      %p264 = scmp.le.s32.totalorder 1, %s17
      %p265 = scmp.lt.s32.totalorder %s17, 3
      %p266 = pnand %p264, %p265
      %p267 = pneg %p266
      // Predicated region
      $region49: #{tpu_custom_call.1} parent=5 // pred_check
        _
      $region50: #{tpu_custom_call.1} parent=5 // pred_check_branch
        %269 = sbr.rel (%p266) target = $region52
      $region51: #{tpu_custom_call.1} parent=5 // pred_region
        %s270 = ssub.s32 %s17, 1
        %p271 = scmp.lt.s32.totalorder %s22, 1
        %s272 = scalar_select %p271, %s22, 1
        %s273 = smul.addr %s272, 5
        %s274 = smul.addr %s273, 8
        %s275 = scalar_lea.vmem %s0, %s274
        %p276 = pneg %p43
        %p277 = pneg %p40
        %p278 = pneg %p64
        %p279 = pneg %p61
        %p280 = pneg %p85
        %p281 = pneg %p82
        %p282 = pneg %p106
        %p283 = pneg %p103
        %p284 = pneg %p127
        %p285 = pneg %p124
        %p286 = pneg %p148
        %p287 = pneg %p145
        %p288 = pneg %p169
        %p289 = pneg %p166
        %p290 = pneg %p190
        %p291 = pneg %p187
        %p292 = pneg %p216
        %p293 = pneg %p213
        %s294 = sand.u32 %s203, 1
        %s295 = scalar_lea.sflag [#allocation3], %s294
        %s296 = sand.u32 %s203, 1
        %s297 = smul.addr %s296, 8
        %s298 = scalar_lea.vmem [#allocation2], %s297
        %p299 = scmp.lt.s32.totalorder %s22, 1
        %s300 = scalar_select %p299, %s22, 1
        %s301 = smul.addr %s300, 5
        %s302 = smul.addr %s301, 8
        %s303 = scalar_lea.vmem %s0, %s302
        %v304 = vld [vmem:[%s303] sm:$0xff]
        %v305 = vld [vmem:[%s303 + $0x8] sm:$0xff]
        %v306 = vld [vmem:[%s303 + $0x10] sm:$0xff]
        %v307 = vld [vmem:[%s303 + $0x18] sm:$0xff]
        %v308 = vld [vmem:[%s303 + $0x20] sm:$0xf]
        %v309 = vld [vmem:[%s2] sm:$0xff]
        %v310 = vld [vmem:[%s2 + $0x8] sm:$0xff]
        %v311 = vld [vmem:[%s2 + $0x10] sm:$0xff]
        %v312 = vld [vmem:[%s2 + $0x18] sm:$0xff]
        %v313 = vld [vmem:[%s2 + $0x20] sm:$0xf]
        %v314 = vld [vmem:[%s3] sm:$0xff]
        %v315 = vld [vmem:[%s3 + $0x8] sm:$0xff]
        %v316 = vld [vmem:[%s3 + $0x10] sm:$0xff]
        %v317 = vld [vmem:[%s3 + $0x18] sm:$0xff]
        %v318 = vld [vmem:[%s3 + $0x20] sm:$0xf]
        %320 = vset.pattern.permute.xlu0 0
        %321 = vperm.xlu0 %320, %v314
        %v322 = vpop.permute.xlu0 %321
        %325 = vset.pattern.permute.xlu0 0
        %326 = vperm.xlu0 %325, %v315
        %v327 = vpop.permute.xlu0 %326
        %330 = vset.pattern.permute.xlu0 0
        %331 = vperm.xlu0 %330, %v316
        %v332 = vpop.permute.xlu0 %331
        %335 = vset.pattern.permute.xlu0 0
        %336 = vperm.xlu0 %335, %v317
        %v337 = vpop.permute.xlu0 %336
        %340 = vset.pattern.permute.xlu0 0
        %341 = vperm.xlu0 %340, %v318
        %v342 = vpop.permute.xlu0 %341
        %vm344 = vcmask 293888
        %v346 = vsel %vm344, %v309, 0
        %v349 = vsel %vm344, %v310, 0
        %v352 = vsel %vm344, %v311, 0
        %v355 = vsel %vm344, %v312, 0
        %v358 = vsel %vm344, %v313, 0
        %vm360 = vcmask 1043456
        %v362 = vsel %vm360, %v308, 0
        %364 = vmatpush.msra.mxu0 0.0
        %365 = vmatpush.msra.mxu0 0.0
        %366 = vmatpush.msra.mxu0 0.0
        %367 = vmatpush.msra.mxu0 0.0
        %368 = vmatpush.msra.mxu0 0.0
        %369 = vmatpush.msra.mxu0 0.0
        %370 = vmatpush.msra.mxu0 0.0
        %371 = vmatpush.msra.mxu0 0.0
        %372 = vmatpush.msra.mxu0 0.0
        %373 = vmatpush.msra.mxu0 0.0
        %374 = vmatpush.msra.mxu0 0.0
        %375 = vmatpush.msra.mxu0 %v362
        %376 = vmatpush.msra.mxu0 %v307
        %377 = vmatpush.msra.mxu0 %v306
        %378 = vmatpush.msra.mxu0 %v305
        %379 = vmatpush.msra.mxu0 %v304
        %380 = vmatmul.f32.gmra.mxu0 %v346
        %v381 = vpop.f32.mrf.mxu0
        %v382 = vadd.f32 %v322, %v381
        %383 = vmatmul.f32.gmra.mxu0 %v349
        %v384 = vpop.f32.mrf.mxu0
        %v385 = vadd.f32 %v327, %v384
        %386 = vmatmul.f32.gmra.mxu0 %v352
        %v387 = vpop.f32.mrf.mxu0
        %v388 = vadd.f32 %v332, %v387
        %389 = vmatmul.f32.gmra.mxu0 %v355
        %v390 = vpop.f32.mrf.mxu0
        %v391 = vadd.f32 %v337, %v390
        %392 = vmatmul.f32.gmra.mxu0 %v358
        %v393 = vpop.f32.mrf.mxu0
        %v394 = vadd.f32 %v342, %v393
        %395 = vdwg.mxu0
        %v396 = vmax.f32 %v382, 0.0
        %v397 = vmax.f32 %v385, 0.0
        %v398 = vmax.f32 %v388, 0.0
        %v399 = vmax.f32 %v391, 0.0
        %v400 = vmax.f32 %v394, 0.0
        %v401 = vld [vmem:[%s4] sm:$0xff]
        %v402 = vld [vmem:[%s5] sm:$0xff]
        %v404 = vsel %vm344, %v402, 0
        %v407 = vsel %vm360, %v400, 0
        %409 = vmatpush.msra.mxu0 0.0
        %410 = vmatpush.msra.mxu0 0.0
        %411 = vmatpush.msra.mxu0 0.0
        %412 = vmatpush.msra.mxu0 0.0
        %413 = vmatpush.msra.mxu0 0.0
        %414 = vmatpush.msra.mxu0 0.0
        %415 = vmatpush.msra.mxu0 0.0
        %416 = vmatpush.msra.mxu0 0.0
        %417 = vmatpush.msra.mxu0 0.0
        %418 = vmatpush.msra.mxu0 0.0
        %419 = vmatpush.msra.mxu0 0.0
        %420 = vmatpush.msra.mxu0 %v407
        %421 = vmatpush.msra.mxu0 %v399
        %422 = vmatpush.msra.mxu0 %v398
        %423 = vmatpush.msra.mxu0 %v397
        %424 = vmatpush.msra.mxu0 %v396
        %425 = vmatmul.f32.gmra.mxu0 %v404
        %v426 = vpop.f32.mrf.mxu0
        %v427 = vadd.f32 0.0, %v426
        %428 = vdwg.mxu0
        %v430 = vsel %vm344, %v401, 0
        %432 = vmatpush.msra.mxu0 0.0
        %433 = vmatpush.msra.mxu0 0.0
        %434 = vmatpush.msra.mxu0 0.0
        %435 = vmatpush.msra.mxu0 0.0
        %436 = vmatpush.msra.mxu0 0.0
        %437 = vmatpush.msra.mxu0 0.0
        %438 = vmatpush.msra.mxu0 0.0
        %439 = vmatpush.msra.mxu0 0.0
        %440 = vmatpush.msra.mxu0 0.0
        %441 = vmatpush.msra.mxu0 0.0
        %442 = vmatpush.msra.mxu0 0.0
        %443 = vmatpush.msra.mxu0 %v362
        %444 = vmatpush.msra.mxu0 %v307
        %445 = vmatpush.msra.mxu0 %v306
        %446 = vmatpush.msra.mxu0 %v305
        %447 = vmatpush.msra.mxu0 %v304
        %448 = vmatmul.f32.gmra.mxu0 %v430
        %v449 = vpop.f32.mrf.mxu0
        %v450 = vadd.f32 %v427, %v449
        %451 = vdwg.mxu0
        %v452 = vld [vmem:[%s6] sm:$0xff]
        %v453 = vld [vmem:[%s1] sm:$0xff]
        %v454 = vld [vmem:[%s1 + $0x8] sm:$0x1]
        %vm455 = vcmask 72704
        %v457 = vsel %vm455, %v452, 0
        %vm459 = vcmask 1040384
        %v461 = vsel %vm459, %v454, 0
        %463 = vmatpush.msra.mxu0 0.0
        %464 = vmatpush.msra.mxu0 0.0
        %465 = vmatpush.msra.mxu0 0.0
        %466 = vmatpush.msra.mxu0 0.0
        %467 = vmatpush.msra.mxu0 0.0
        %468 = vmatpush.msra.mxu0 0.0
        %469 = vmatpush.msra.mxu0 0.0
        %470 = vmatpush.msra.mxu0 0.0
        %471 = vmatpush.msra.mxu0 0.0
        %472 = vmatpush.msra.mxu0 0.0
        %473 = vmatpush.msra.mxu0 0.0
        %474 = vmatpush.msra.mxu0 0.0
        %475 = vmatpush.msra.mxu0 0.0
        %476 = vmatpush.msra.mxu0 0.0
        %477 = vmatpush.msra.mxu0 %v461
        %478 = vmatpush.msra.mxu0 %v453
        %479 = vmatmul.f32.gmra.mxu0 %v457
        %v480 = vpop.f32.mrf.mxu0
        %v481 = vadd.f32 0.0, %v480
        %482 = vdwg.mxu0
        %v483 = vadd.f32 %v450, %v481
        %v484 = vld [vmem:[%s7] sm:$0xff]
        %486 = vset.pattern.permute.xlu0 0
        %487 = vperm.xlu0 %486, %v484
        %v488 = vpop.permute.xlu0 %487
        %v490 = vadd.f32 %v483, %v488
        %v491 = vmax.f32 %v490, 0.0
        %vm492 = vcmask 523264
        %493 = vst.msk [vmem:[%s298] sm:$0xff] %vm492, %v491
        %s494 = sand.u32 %s203, 1
        %s495 = scalar_lea.sflag [#allocation3], %s494
        %s496 = sand.u32 %s203, 1
        %s497 = smul.addr %s496, 8
        %s498 = scalar_lea.vmem [#allocation2], %s497
        // Predicated region
        $region53: #{tpu_custom_call.1} parent=51 // pred_check
          %p499 = pneg %p213
        $region54: #{tpu_custom_call.1} parent=51 // pred_check_branch
          %501 = sbr.rel (%p499) target = $region56
        $region55: #{tpu_custom_call.1} parent=51 // pred_region
          %503 = vsyncadd %s495, 0
          %s504 = smul.addr %s22, 8
          %s505 = scalar_lea.hbm %s8, %s504
          %s507 = sshll.u32 %s498, 4
          %s508 = int_to_ptr.vmem [resolvable:$true] %s507
          %s509 = sshll.u32 %s505, 4
          %s510 = int_to_ptr.hbm [resolvable:$true] %s509
          %512 = dma.vmem_to_hbm [thread:$0]  %s508, 128, %s510, %s495
        $region56: #{tpu_custom_call.1} parent=51 // pred_fallthru
          _
      $region52: #{tpu_custom_call.1} parent=5 // pred_fallthru
        _
      %p513 = scmp.le.s32.totalorder 2, %s17
      // Predicated region
      $region57: #{tpu_custom_call.1} parent=5 // pred_check
        %p514 = pneg %p513
      $region58: #{tpu_custom_call.1} parent=5 // pred_check_branch
        %516 = sbr.rel (%p514) target = $region60
      $region59: #{tpu_custom_call.1} parent=5 // pred_region
        %s517 = ssub.s32 %s17, 2
        // Predicated region
        $region61: #{tpu_custom_call.1} parent=59 // pred_check
          %p518 = pneg %p219
        $region62: #{tpu_custom_call.1} parent=59 // pred_check_branch
          %520 = sbr.rel (%p518) target = $region64
        $region63: #{tpu_custom_call.1} parent=59 // pred_region
          %s521 = sand.u32 %s204, 1
          %s522 = scalar_lea.sflag [#allocation3], %s521
          %s523 = sand.u32 %s204, 1
          %s524 = smul.addr %s523, 8
          %s525 = scalar_lea.vmem [#allocation2], %s524
          %527 = dma.done %s522, 128
        $region64: #{tpu_custom_call.1} parent=59 // pred_fallthru
          _
      $region60: #{tpu_custom_call.1} parent=5 // pred_fallthru
        _
    $region6: #{tpu_custom_call.1} parent=1 // loop_footer
      %s21 = sadd.s32 1, %s17
    $region7: #{tpu_custom_call.1} parent=1 // loop_footer_branch
      %16 = sbr.rel target = $region3
    $region8: #{tpu_custom_call.1} parent=1 // loop_exit
      _
    %528 = vsyncpa [#allocation3], 1
    %s529 = scalar_lea.sflag [#allocation3], 1
    %530 = vsyncpa %s529, 1

</llo_original>
